<compile_context>
chip_gen: v5e
topology: v5e:2x2
jax: 0.10.0
libtpu: 0.0.40
codegen_flags: <defaults>
</compile_context>

<pallas_src>
import functools
import math

import jax
import jax.numpy as jnp
from jax.experimental import pallas as pl
from jax.experimental.pallas import tpu as pltpu


_LANES = 128                 # vreg lane width
_SUB_ROWS = 256              # rows per inner accumulation chunk (bounds live vregs)
_MAX_ROWS_PER_BLOCK = 4096   # 4096x128 f32 = 2 MiB/input/buffer; 8 MiB double-buffered
_SPLIT_ROWS = 512            # >= this many rows: use >= 2 grid steps (v7x has 2 TCs)

_EPS = 1e-14
_LOG_EPS = math.log(_EPS)            # exact log(1e-14) = -32.23619...
_SCALE = float(2.0 ** 40)            # exact power-of-two rescale for the EUP log
_LOG_SCALE = 40.0 * math.log(2.0)    # log(2^40)


def _safe_log_eps(x):
    """log(x + 1e-14) for x >= 0, robust on the TPU EUP.

    The argument is rescaled by an exact power of two so the hardware log never
    sees a ~1e-14 input (observed to underflow to -inf), and the result is
    clamped at the exact log(1e-14) lower bound (a no-op for x >= 0, but it
    turns any residual -inf into the correct value).
    """
    y = (jnp.log((x + jnp.float32(_EPS)) * jnp.float32(_SCALE))
         - jnp.float32(_LOG_SCALE))
    return jnp.maximum(y, jnp.float32(_LOG_EPS))


def _elem_loglik(p, t, binary_targets):
    """Per-element NEGATIVE loss contribution (epilogue divides by -N).

    general:  t*L(p) + (1-t)*L(1-p) + p*L(t) + (1-p)*L(1-t),  L(x)=log(x+eps)
    binary (t in {0,1}):  L(q) + log(eps)*(1-q), q = p if t==1 else 1-p
        -- identical f32 result but 1 EUP log / element instead of 4.
    """
    one = jnp.float32(1.0)
    if binary_targets:
        q = jnp.where(t > jnp.float32(0.5), p, one - p)
        return _safe_log_eps(q) + jnp.float32(_LOG_EPS) * (one - q)
    return (t * _safe_log_eps(p) + (one - t) * _safe_log_eps(one - p)
            + p * _safe_log_eps(t) + (one - p) * _safe_log_eps(one - t))


def _sym_bce_kernel(p_ref, t_ref, o_ref, *, sub_rows, valid_rows_last,
                    binary_targets):
    """One grid step: (8,128) f32 partial sum of the per-element log-likelihood."""
    rows_per_block = p_ref.shape[0]
    nsub = rows_per_block // sub_rows      # static; wrapper guarantees divisibility

    def chunk_sum(j, masked):
        start = j * sub_rows
        if not isinstance(start, int):
            start = pl.multiple_of(start, sub_rows)
        p = p_ref[pl.ds(start, sub_rows), :].astype(jnp.float32)
        t = t_ref[pl.ds(start, sub_rows), :].astype(jnp.float32)
        s = _elem_loglik(p, t, binary_targets)
        if masked:
            # Zero rows past the logical end of the array (Pallas edge-block
            # garbage).  Keep the SELECT form: a multiply would let NaN/Inf
            # computed from garbage lanes poison the sum.
            row = jax.lax.broadcasted_iota(jnp.int32, s.shape, 0)
            s = jnp.where(row < (valid_rows_last - j * sub_rows), s,
                          jnp.float32(0.0))
        # (sub,128) -> (sub//8, 8, 128) -> vreg-wise adds down to one full
        # (8,128) vreg: reduction stays on the VALU, store is an unmasked vst.
        return s.reshape(sub_rows // 8, 8, _LANES).sum(axis=0)

    def block_sum(masked):
        if nsub == 1:
            return chunk_sum(0, masked)
        return jax.lax.fori_loop(
            0, nsub, lambda j, acc: acc + chunk_sum(j, masked),
            jnp.zeros((8, _LANES), jnp.float32))

    if valid_rows_last < rows_per_block:
        # Only the final grid step pays for the iota/compare/select tail mask.
        last = pl.num_programs(0) - 1

        @pl.when(pl.program_id(0) == last)
        def _():
            o_ref[...] = block_sum(True)[None]

        @pl.when(pl.program_id(0) != last)
        def _():
            o_ref[...] = block_sum(False)[None]
    else:
        o_ref[...] = block_sum(False)[None]


def sym_bce_loss(y_pred, y_true, dp=None, *, binary_targets=False):
    """Forward pass of sym_bce_loss; `dp` is accepted but unused (as in the module).

    Set binary_targets=True when y_true is a {0,1} mask: same f32 result, but
    the kernel needs 1 log per element instead of 4.
    """
    del dp
    assert y_pred.shape == y_true.shape, (y_pred.shape, y_true.shape)
    total = int(math.prod(int(s) for s in y_pred.shape))

    # Native dtypes all the way to the kernel (it casts per tile), so bf16/int8
    # inputs halve/quarter HBM traffic.
    p_flat = y_pred.reshape(-1)
    t_flat = y_true.reshape(-1)

    rows = total // _LANES
    tail = total - rows * _LANES            # < 128 leftover elems -> JAX epilogue

    if rows < 8:
        # Tiny input (< 1024 elements): per-step overhead would dominate any
        # kernel; same math in plain f32 JAX.
        s = _elem_loglik(p_flat.astype(jnp.float32), t_flat.astype(jnp.float32),
                         binary_targets)
        return -jnp.sum(s) / jnp.float32(total)

    # ---- grid / block geometry ------------------------------------------
    want_chunks = pl.cdiv(rows, _MAX_ROWS_PER_BLOCK)
    if rows >= _SPLIT_ROWS:
        want_chunks = max(want_chunks, 2)            # feed both v7x TensorCores
    tr = pl.cdiv(rows, want_chunks)
    tr = min(pl.cdiv(tr, 8) * 8, (rows // 8) * 8)    # sublane multiple, <= array rows
    if tr > _SUB_ROWS:
        tr = (tr // _SUB_ROWS) * _SUB_ROWS           # whole number of inner sub-chunks
    grid = pl.cdiv(rows, tr)
    valid_rows_last = rows - (grid - 1) * tr         # real rows in the final block
    sub_rows = min(_SUB_ROWS, tr)

    # 128-aligned prefix goes to the kernel (no full-tensor pad copy); when the
    # shape is already lane-aligned (tail == 0) this reshape is layout-free.
    p2 = p_flat[: rows * _LANES].reshape(rows, _LANES)
    t2 = t_flat[: rows * _LANES].reshape(rows, _LANES)

    kernel = functools.partial(
        _sym_bce_kernel,
        sub_rows=sub_rows,
        valid_rows_last=valid_rows_last,
        binary_targets=binary_targets,
    )

    block_sums = pl.pallas_call(
        kernel,
        out_shape=jax.ShapeDtypeStruct((grid, 8, _LANES), jnp.float32),
        grid_spec=pltpu.PrefetchScalarGridSpec(
            num_scalar_prefetch=0,
            grid=(grid,),
            in_specs=[
                pl.BlockSpec((tr, _LANES), lambda i: (i, 0)),
                pl.BlockSpec((tr, _LANES), lambda i: (i, 0)),
            ],
            out_specs=pl.BlockSpec((1, 8, _LANES), lambda i: (i, 0, 0)),
        ),
        compiler_params=pltpu.CompilerParams(
            dimension_semantics=("parallel",),       # steps write independent partials
            vmem_limit_bytes=32 * 1024 * 1024,       # headroom for 4096-row f32 blocks
        ),
    )(p2, t2)

    s_total = jnp.sum(block_sums)
    if tail:
        # <128 trailing elements folded into the epilogue instead of padding
        # (avoids re-materializing both full inputs in HBM).
        pt = p_flat[rows * _LANES:].astype(jnp.float32)
        tt = t_flat[rows * _LANES:].astype(jnp.float32)
        s_total = s_total + jnp.sum(_elem_loglik(pt, tt, binary_targets))

    # Single exact divide; the per-element negation was folded out of the kernel.
    return -s_total / jnp.float32(total)


def _reference(y_pred, y_true):
    p = y_pred.astype(jnp.float32)
    t = y_true.astype(jnp.float32)
    n = p.size
    eps = 1e-14
    bce = jnp.sum(-t * jnp.log(p + eps) - (1.0 - t) * jnp.log(1.0 - p + eps)) / n
    rbce = jnp.sum(-p * jnp.log(t + eps) - (1.0 - p) * jnp.log(1.0 - t + eps)) / n
    return bce + rbce


if __name__ == "__main__":
    key = jax.random.PRNGKey(0)
    k1, k2 = jax.random.split(key)
    B, C, W, H = 2, 4, 16, 16
    # y_pred: probabilities in [0, 1); y_true: binary mask; dp is unused.
    y_pred = jax.random.uniform(k1, (B, C, W, H), dtype=jnp.float32)
    y_true = (jax.random.uniform(k2, (B, C, W, H), dtype=jnp.float32) > 0.5
              ).astype(jnp.float32)
    dp = jnp.zeros((B, C, W, H), dtype=jnp.float32)

    ref = _reference(y_pred, y_true)

    loss = jax.block_until_ready(sym_bce_loss(y_pred, y_true, dp))
    assert jnp.allclose(loss, ref, rtol=1e-3, atol=2e-3), (loss, ref)

    # Binary-target fast path (1 EUP log / element instead of 4) must agree for
    # {0,1} masks.
    loss_fast = jax.block_until_ready(
        sym_bce_loss(y_pred, y_true, dp, binary_targets=True))
    assert jnp.allclose(loss_fast, ref, rtol=1e-3, atol=2e-3), (loss_fast, ref)

    print("KERNEL_OK")
</pallas_src>

<mosaic_0001>
module attributes {stable_mosaic.version = 11 : i64} {
  func.func @_sym_bce_kernel(%arg0: i32, %arg1: memref<16x128xf32, #tpu.memory_space<vmem>>, %arg2: memref<16x128xf32, #tpu.memory_space<vmem>>, %arg3: memref<1x8x128xf32, #tpu.memory_space<vmem>>) attributes {dimension_semantics = [#tpu.dimension_semantics<parallel>], iteration_bounds = array<i64: 1>, scalar_prefetch = 0 : i64, scratch_operands = 0 : i64, tpu.core_type = #tpu.core_type<tc>, window_params = [{transform_indices = @transform_0, window_bounds = array<i64: 16, 128>}, {transform_indices = @transform_1, window_bounds = array<i64: 16, 128>}, {transform_indices = @transform_2, window_bounds = array<i64: 1, 8, 128>}]} {
    %c0 = arith.constant 0 : index
    %c0_0 = arith.constant 0 : index
    %0 = vector.load %arg1[%c0, %c0_0] : memref<16x128xf32, #tpu.memory_space<vmem>>, vector<16x128xf32>
    %c0_1 = arith.constant 0 : index
    %c0_2 = arith.constant 0 : index
    %1 = vector.load %arg2[%c0_1, %c0_2] : memref<16x128xf32, #tpu.memory_space<vmem>>, vector<16x128xf32>
    %cst = arith.constant 9.99999982E-15 : f32
    %2 = vector.broadcast %cst : f32 to vector<16x128xf32>
    %3 = arith.addf %0, %2 : vector<16x128xf32>
    %cst_3 = arith.constant 1.09951163E+12 : f32
    %4 = vector.broadcast %cst_3 : f32 to vector<16x128xf32>
    %5 = arith.mulf %3, %4 : vector<16x128xf32>
    %6 = math.log %5 : vector<16x128xf32>
    %cst_4 = arith.constant 27.7258873 : f32
    %7 = vector.broadcast %cst_4 : f32 to vector<16x128xf32>
    %8 = arith.subf %6, %7 : vector<16x128xf32>
    %cst_5 = arith.constant -32.2361908 : f32
    %9 = vector.broadcast %cst_5 : f32 to vector<16x128xf32>
    %10 = arith.maximumf %8, %9 : vector<16x128xf32>
    %11 = arith.mulf %1, %10 : vector<16x128xf32>
    %cst_6 = arith.constant 1.000000e+00 : f32
    %12 = vector.broadcast %cst_6 : f32 to vector<16x128xf32>
    %13 = arith.subf %12, %1 : vector<16x128xf32>
    %cst_7 = arith.constant 1.000000e+00 : f32
    %14 = vector.broadcast %cst_7 : f32 to vector<16x128xf32>
    %15 = arith.subf %14, %0 : vector<16x128xf32>
    %cst_8 = arith.constant 9.99999982E-15 : f32
    %16 = vector.broadcast %cst_8 : f32 to vector<16x128xf32>
    %17 = arith.addf %15, %16 : vector<16x128xf32>
    %cst_9 = arith.constant 1.09951163E+12 : f32
    %18 = vector.broadcast %cst_9 : f32 to vector<16x128xf32>
    %19 = arith.mulf %17, %18 : vector<16x128xf32>
    %20 = math.log %19 : vector<16x128xf32>
    %cst_10 = arith.constant 27.7258873 : f32
    %21 = vector.broadcast %cst_10 : f32 to vector<16x128xf32>
    %22 = arith.subf %20, %21 : vector<16x128xf32>
    %cst_11 = arith.constant -32.2361908 : f32
    %23 = vector.broadcast %cst_11 : f32 to vector<16x128xf32>
    %24 = arith.maximumf %22, %23 : vector<16x128xf32>
    %25 = arith.mulf %13, %24 : vector<16x128xf32>
    %26 = arith.addf %11, %25 : vector<16x128xf32>
    %cst_12 = arith.constant 9.99999982E-15 : f32
    %27 = vector.broadcast %cst_12 : f32 to vector<16x128xf32>
    %28 = arith.addf %1, %27 : vector<16x128xf32>
    %cst_13 = arith.constant 1.09951163E+12 : f32
    %29 = vector.broadcast %cst_13 : f32 to vector<16x128xf32>
    %30 = arith.mulf %28, %29 : vector<16x128xf32>
    %31 = math.log %30 : vector<16x128xf32>
    %cst_14 = arith.constant 27.7258873 : f32
    %32 = vector.broadcast %cst_14 : f32 to vector<16x128xf32>
    %33 = arith.subf %31, %32 : vector<16x128xf32>
    %cst_15 = arith.constant -32.2361908 : f32
    %34 = vector.broadcast %cst_15 : f32 to vector<16x128xf32>
    %35 = arith.maximumf %33, %34 : vector<16x128xf32>
    %36 = arith.mulf %0, %35 : vector<16x128xf32>
    %37 = arith.addf %26, %36 : vector<16x128xf32>
    %cst_16 = arith.constant 1.000000e+00 : f32
    %38 = vector.broadcast %cst_16 : f32 to vector<16x128xf32>
    %39 = arith.subf %38, %0 : vector<16x128xf32>
    %cst_17 = arith.constant 1.000000e+00 : f32
    %40 = vector.broadcast %cst_17 : f32 to vector<16x128xf32>
    %41 = arith.subf %40, %1 : vector<16x128xf32>
    %cst_18 = arith.constant 9.99999982E-15 : f32
    %42 = vector.broadcast %cst_18 : f32 to vector<16x128xf32>
    %43 = arith.addf %41, %42 : vector<16x128xf32>
    %cst_19 = arith.constant 1.09951163E+12 : f32
    %44 = vector.broadcast %cst_19 : f32 to vector<16x128xf32>
    %45 = arith.mulf %43, %44 : vector<16x128xf32>
    %46 = math.log %45 : vector<16x128xf32>
    %cst_20 = arith.constant 27.7258873 : f32
    %47 = vector.broadcast %cst_20 : f32 to vector<16x128xf32>
    %48 = arith.subf %46, %47 : vector<16x128xf32>
    %cst_21 = arith.constant -32.2361908 : f32
    %49 = vector.broadcast %cst_21 : f32 to vector<16x128xf32>
    %50 = arith.maximumf %48, %49 : vector<16x128xf32>
    %51 = arith.mulf %39, %50 : vector<16x128xf32>
    %52 = arith.addf %37, %51 : vector<16x128xf32>
    %53 = vector.shape_cast %52 : vector<16x128xf32> to vector<2x8x128xf32>
    %cst_22 = arith.constant dense<0.000000e+00> : vector<8x128xf32>
    %54 = vector.multi_reduction <add>, %53, %cst_22 [0] : vector<2x8x128xf32> to vector<8x128xf32>
    %55 = vector.shape_cast %54 : vector<8x128xf32> to vector<1x8x128xf32>
    %c0_23 = arith.constant 0 : index
    %c0_24 = arith.constant 0 : index
    %c0_25 = arith.constant 0 : index
    %56 = vector.load %arg3[%c0_23, %c0_24, %c0_25] : memref<1x8x128xf32, #tpu.memory_space<vmem>>, vector<1x8x128xf32>
    tpu.vector_store %arg3[%c0_23, %c0_24, %c0_25], %55 {strides = array<i32>} : memref<1x8x128xf32, #tpu.memory_space<vmem>>, vector<1x8x128xf32>,
    return
  }
  func.func @transform_0(%arg0: i32) -> (i32, i32) {
    %c0_i32 = arith.constant 0 : i32
    %c0_i32_0 = arith.constant 0 : i32
    return %arg0, %c0_i32 : i32, i32
  }
  func.func @transform_1(%arg0: i32) -> (i32, i32) {
    %c0_i32 = arith.constant 0 : i32
    %c0_i32_0 = arith.constant 0 : i32
    return %arg0, %c0_i32 : i32, i32
  }
  func.func @transform_2(%arg0: i32) -> (i32, i32, i32) {
    %c0_i32 = arith.constant 0 : i32
    %c0_i32_0 = arith.constant 0 : i32
    %c0_i32_1 = arith.constant 0 : i32
    return %arg0, %c0_i32, %c0_i32_0 : i32, i32, i32
  }
}

</mosaic_0001>

<llo_original>
// kernel: tpu_custom_call.1
$region0: #{tpu_custom_call.1}
  #allocation0 [shape = 'u32[]', space=smem, size = 0x4, offset = 0x4, fixed_abs, tag = 'smem constant byte address 0x4 - core index']
  #allocation1 [shape = 'u32[72,128]{1,0:T(1,128)}', space=vmem, size = 0x9000, scoped, tag = 'internal scratch']
  %s0 = inlined_call_operand.hbm [shape: f32[16,128], index: 0, kind: input, shape index: {}]
  %s1 = inlined_call_operand.hbm [shape: f32[16,128], index: 1, kind: input, shape index: {}]
  %s2 = inlined_call_operand.hbm [shape: f32[1,8,128], index: 2, kind: output, shape index: {}]
  %s3 = sld [smem:[#allocation0]]
  $region26: #{tpu_custom_call.1} parent=0
    _
  %s5 = ssub.s32 1, %s3
  %s6 = scalar_select 0, %s5, %s3
  $region1: #{tpu_custom_call.1} parent=0
    #allocation2 [shape = 'u8[8192]{0}', space=vmem, size = 0x2000, scoped, tag = 'input window, operand 0, single buffered']
    #allocation3 [shape = 's32[1]{0}', space=sflag, size = 0x4, scoped, tag = 'scoped memory for tpu_custom_call.1']
    #allocation4 [shape = 's32[1]{0}', space=sflag, size = 0x4, scoped, tag = 'scoped memory for tpu_custom_call.1']
    #allocation5 [shape = 'u8[8192]{0}', space=vmem, size = 0x2000, scoped, tag = 'input window, operand 1, single buffered']
    #allocation6 [shape = 's32[1]{0}', space=sflag, size = 0x4, scoped, tag = 'scoped memory for tpu_custom_call.1']
    #allocation7 [shape = 'u8[4096]{0}', space=vmem, size = 0x1000, scoped, tag = 'output window, operand 0, single buffered']
    %7 = vsyncpa [#allocation3], 0
    %8 = vsyncpa [#allocation6], 0
    %9 = vsyncpa [#allocation4], 0
    // Predicated region
    $region2: #{tpu_custom_call.1} parent=1 // pred_check
      _
    $region3: #{tpu_custom_call.1} parent=1 // pred_check_branch
      %11 = sbr.rel (0) target = $region5
    $region4: #{tpu_custom_call.1} parent=1 // pred_region
      %13 = vsyncadd [#allocation3], 0
      %s14 = sshll.u32 %s0, 4
      %s15 = int_to_ptr.hbm [resolvable:$true] %s14
      %s16 = sshll.u32 [#allocation2], 4
      %s17 = int_to_ptr.vmem [resolvable:$true] %s16
      %22 = dma.hbm_to_vmem [thread:$0]  %s15, 256, %s17, [#allocation3], 128, 128, 8
    $region5: #{tpu_custom_call.1} parent=1 // pred_fallthru
      _
    // Predicated region
    $region6: #{tpu_custom_call.1} parent=1 // pred_check
      _
    $region7: #{tpu_custom_call.1} parent=1 // pred_check_branch
      %24 = sbr.rel (0) target = $region9
    $region8: #{tpu_custom_call.1} parent=1 // pred_region
      %26 = vsyncadd [#allocation6], 0
      %s27 = sshll.u32 %s1, 4
      %s28 = int_to_ptr.hbm [resolvable:$true] %s27
      %s29 = sshll.u32 [#allocation5], 4
      %s30 = int_to_ptr.vmem [resolvable:$true] %s29
      %35 = dma.hbm_to_vmem [thread:$0]  %s28, 256, %s30, [#allocation6], 128, 128, 8
    $region9: #{tpu_custom_call.1} parent=1 // pred_fallthru
      _
    // Predicated region
    $region10: #{tpu_custom_call.1} parent=1 // pred_check
      _
    $region11: #{tpu_custom_call.1} parent=1 // pred_check_branch
      %37 = sbr.rel (0) target = $region13
    $region12: #{tpu_custom_call.1} parent=1 // pred_region
      %39 = dma.done [#allocation3], 256
    $region13: #{tpu_custom_call.1} parent=1 // pred_fallthru
      _
    // Predicated region
    $region14: #{tpu_custom_call.1} parent=1 // pred_check
      _
    $region15: #{tpu_custom_call.1} parent=1 // pred_check_branch
      %41 = sbr.rel (0) target = $region17
    $region16: #{tpu_custom_call.1} parent=1 // pred_region
      %43 = dma.done [#allocation6], 256
    $region17: #{tpu_custom_call.1} parent=1 // pred_fallthru
      _
    %v44 = vld [vmem:[#allocation2] sm:$0xff]
    %v45 = vld [vmem:[#allocation2 + $0x8] sm:$0xff]
    %v46 = vld [vmem:[#allocation5] sm:$0xff]
    %v47 = vld [vmem:[#allocation5 + $0x8] sm:$0xff]
    %v48 = vadd.f32 %v44, 1e-14
    %v49 = vadd.f32 %v45, 1e-14
    %v50 = vmul.f32 %v48, 1.0995116e+12
    %v51 = vmul.f32 %v49, 1.0995116e+12
    %v52 = vlog2.pop %v50
    %v53 = vmul.f32 %v52, 0.6931472
    %v54 = vlog2.pop %v51
    %v55 = vmul.f32 %v54, 0.6931472
    %v56 = vsub.f32 %v53, 27.725887
    %v57 = vsub.f32 %v55, 27.725887
    %v58 = vmax.f32 %v56, -32.23619
    %v59 = vmax.f32 %v57, -32.23619
    %v60 = vmul.f32 %v46, %v58
    %v61 = vmul.f32 %v47, %v59
    %v62 = vsub.f32 1.0, %v46
    %v63 = vsub.f32 1.0, %v47
    %v64 = vsub.f32 1.0, %v44
    %v65 = vsub.f32 1.0, %v45
    %v66 = vadd.f32 %v64, 1e-14
    %v67 = vadd.f32 %v65, 1e-14
    %v68 = vmul.f32 %v66, 1.0995116e+12
    %v69 = vmul.f32 %v67, 1.0995116e+12
    %v70 = vlog2.pop %v68
    %v71 = vmul.f32 %v70, 0.6931472
    %v72 = vlog2.pop %v69
    %v73 = vmul.f32 %v72, 0.6931472
    %v74 = vsub.f32 %v71, 27.725887
    %v75 = vsub.f32 %v73, 27.725887
    %v76 = vmax.f32 %v74, -32.23619
    %v77 = vmax.f32 %v75, -32.23619
    %v78 = vmul.f32 %v62, %v76
    %v79 = vmul.f32 %v63, %v77
    %v80 = vadd.f32 %v60, %v78
    %v81 = vadd.f32 %v61, %v79
    %v82 = vadd.f32 %v46, 1e-14
    %v83 = vadd.f32 %v47, 1e-14
    %v84 = vmul.f32 %v82, 1.0995116e+12
    %v85 = vmul.f32 %v83, 1.0995116e+12
    %v86 = vlog2.pop %v84
    %v87 = vmul.f32 %v86, 0.6931472
    %v88 = vlog2.pop %v85
    %v89 = vmul.f32 %v88, 0.6931472
    %v90 = vsub.f32 %v87, 27.725887
    %v91 = vsub.f32 %v89, 27.725887
    %v92 = vmax.f32 %v90, -32.23619
    %v93 = vmax.f32 %v91, -32.23619
    %v94 = vmul.f32 %v44, %v92
    %v95 = vmul.f32 %v45, %v93
    %v96 = vadd.f32 %v80, %v94
    %v97 = vadd.f32 %v81, %v95
    %v98 = vadd.f32 %v62, 1e-14
    %v99 = vadd.f32 %v63, 1e-14
    %v100 = vmul.f32 %v98, 1.0995116e+12
    %v101 = vmul.f32 %v99, 1.0995116e+12
    %v102 = vlog2.pop %v100
    %v103 = vmul.f32 %v102, 0.6931472
    %v104 = vlog2.pop %v101
    %v105 = vmul.f32 %v104, 0.6931472
    %v106 = vsub.f32 %v103, 27.725887
    %v107 = vsub.f32 %v105, 27.725887
    %v108 = vmax.f32 %v106, -32.23619
    %v109 = vmax.f32 %v107, -32.23619
    %v110 = vmul.f32 %v64, %v108
    %v111 = vmul.f32 %v65, %v109
    %v112 = vadd.f32 %v96, %v110
    %v113 = vadd.f32 %v97, %v111
    %v114 = vadd.f32 %v112, %v113
    %115 = vst [vmem:[#allocation7] sm:$0xff] %v114
    // Predicated region
    $region18: #{tpu_custom_call.1} parent=1 // pred_check
      _
    $region19: #{tpu_custom_call.1} parent=1 // pred_check_branch
      %117 = sbr.rel (0) target = $region21
    $region20: #{tpu_custom_call.1} parent=1 // pred_region
      %119 = vsyncadd [#allocation4], 0
      %s121 = sshll.u32 [#allocation7], 4
      %s122 = int_to_ptr.vmem [resolvable:$true] %s121
      %s123 = sshll.u32 %s2, 4
      %s124 = int_to_ptr.hbm [resolvable:$true] %s123
      %126 = dma.vmem_to_hbm [thread:$0]  %s122, 128, %s124, [#allocation4]
    $region21: #{tpu_custom_call.1} parent=1 // pred_fallthru
      _
    // Predicated region
    $region22: #{tpu_custom_call.1} parent=1 // pred_check
      _
    $region23: #{tpu_custom_call.1} parent=1 // pred_check_branch
      %128 = sbr.rel (0) target = $region25
    $region24: #{tpu_custom_call.1} parent=1 // pred_region
      %130 = dma.done [#allocation4], 128
    $region25: #{tpu_custom_call.1} parent=1 // pred_fallthru
      _
    %131 = vsyncpa [#allocation3], 1
    %132 = vsyncpa [#allocation6], 1
    %133 = vsyncpa [#allocation4], 1

</llo_original>
